<compile_context>
chip_gen: v5e
topology: v5e:2x2
jax: 0.10.0
libtpu: 0.0.40
codegen_flags: <defaults>
</compile_context>

<pallas_src>
import jax
import jax.numpy as jnp
from jax.experimental import pallas as pl
from jax.experimental.pallas import tpu as pltpu

HIDDEN_UNITS = 384


def _cdiv(a, b):
    return -(-a // b)


def _round_up(a, m):
    return _cdiv(a, m) * m


def _qnet_kernel(x_ref, w1_ref, b1_ref, w2_ref, b2_ref, w3_ref, b3_ref, o_ref):
    n_q = w1_ref.shape[0]                   # leading critic axis (1 or 2)
    x = x_ref[...]                          # (tb, F+A), matmul dtype; shared by critics
    cols = []
    for c in range(n_q):                    # static Python unroll
        # fc1: single K=(F+A) matmul (f32 accumulate) + bias + ReLU
        h1 = jnp.dot(x, w1_ref[c], preferred_element_type=jnp.float32) + b1_ref[c]
        h1 = jnp.maximum(h1, 0.0)
        # fc2
        h2 = jnp.dot(h1.astype(w2_ref.dtype), w2_ref[c],
                     preferred_element_type=jnp.float32) + b2_ref[c]
        h2 = jnp.maximum(h2, 0.0)
        # q head: N=1 matmul replaced by VPU multiply + lane reduce (w3 is (1, H) f32)
        cols.append(jnp.sum(h2 * w3_ref[c], axis=-1, keepdims=True) + b3_ref[c])
    q = cols[0] if n_q == 1 else jnp.concatenate(cols, axis=-1)
    o_ref[...] = q.astype(o_ref.dtype)      # (tb, n_q)


def _resident(shape):
    # Full-array block with a constant index_map -> stays in VMEM across steps.
    nd = len(shape)
    return pl.BlockSpec(shape, lambda i, _nd=nd: (0,) * _nd)
    # TODO(synk): pipeline_mode=pl.Buffered(1) would reclaim the second weight
    # buffer; unnecessary at current tile sizes.


def _qnetwork_call(x, stacked_params, *, block_b, matmul_dtype):
    """Run the kernel on x=(B, F+A) with weights stacked on a leading critic axis."""
    w1, b1, w2, b2, w3, b3 = stacked_params
    B, D = x.shape
    n_q, _, H = w1.shape

    # MXU operands may be bf16; biases / elementwise / head stay f32 (v5e VPU has no bf16).
    x = x.astype(matmul_dtype)
    w1 = w1.astype(matmul_dtype)
    w2 = w2.astype(matmul_dtype)
    b1 = b1.astype(jnp.float32)
    b2 = b2.astype(jnp.float32)
    w3 = w3.astype(jnp.float32)
    b3 = b3.astype(jnp.float32)

    # ---- batch tiling: balanced tiles, >= 2 for non-tiny batches (v7x megacore),
    #      tb multiple of 8 (sublane rule) unless it equals the full extent. ----
    n_tiles = _cdiv(B, max(block_b, 8))
    if B >= 64:
        n_tiles = max(n_tiles, 2)
    if n_tiles == 1:
        tb, b_pad = B, B
    else:
        tb = _round_up(_cdiv(B, n_tiles), 8)
        b_pad = n_tiles * tb
    if b_pad != B:
        # Padded rows produce garbage Q values; they are sliced off below and
        # must be masked if a batch reduction is ever fused into this kernel.
        x = jnp.pad(x, ((0, b_pad - B), (0, 0)))
    grid = (b_pad // tb,)

    # ---- VMEM budget estimate -> explicit scoped limit (v5e default is 16 MiB). ----
    lane = 128
    mm_b = jnp.dtype(matmul_dtype).itemsize
    d_pad = _round_up(D, lane)
    h_pad = _round_up(H, lane)
    est = (2 * tb * d_pad * mm_b                                   # x blocks (2x, lane-padded)
           + 2 * tb * _round_up(n_q, lane) * 4                     # out blocks
           + 2 * tb * h_pad * 4 * n_q                              # h1/h2 f32 intermediates
           + 2 * n_q * (_round_up(D, 8) * h_pad + h_pad * h_pad) * mm_b   # w1, w2 (2x)
           + 2 * n_q * 3 * h_pad * 4)                              # b1, b2, w3
    vmem_limit = int(min(max(2 * est, 32 * 1024 * 1024), 48 * 1024 * 1024))

    flops = 2 * b_pad * n_q * (D * H + H * H + H)
    bytes_accessed = (int(x.size) * x.dtype.itemsize
                      + sum(int(a.size) * a.dtype.itemsize
                            for a in (w1, b1, w2, b2, w3, b3))
                      + b_pad * n_q * 4)

    out = pl.pallas_call(
        _qnet_kernel,
        out_shape=jax.ShapeDtypeStruct((b_pad, n_q), jnp.float32),
        grid=grid,
        in_specs=[
            pl.BlockSpec((tb, D), lambda i: (i, 0)),   # x tile
            _resident(w1.shape),                       # W1 (n_q, F+A, H)
            _resident(b1.shape),                       # b1 (n_q, 1, H)
            _resident(w2.shape),                       # W2 (n_q, H, H)
            _resident(b2.shape),                       # b2 (n_q, 1, H)
            _resident(w3.shape),                       # w3 (n_q, 1, H)
            _resident(b3.shape),                       # b3 (n_q, 1, 1)
        ],
        out_specs=pl.BlockSpec((tb, n_q), lambda i: (i, 0)),
        compiler_params=pltpu.CompilerParams(
            dimension_semantics=("parallel",),
            vmem_limit_bytes=vmem_limit),
        cost_estimate=pl.CostEstimate(
            flops=flops, transcendentals=0, bytes_accessed=bytes_accessed),
    )(x, w1, b1, w2, b2, w3, b3)
    return out[:B]


def qnetwork_forward(state, action, params, *, block_b=1024,
                     matmul_dtype=jnp.bfloat16):
    """Pallas implementation of QNetwork.forward(state, action) -> (B, 1)."""
    x = jnp.concatenate([state, action], axis=1)       # trivial 64 B/row copy; merges fc1
    stacked = tuple(p[None] for p in params)
    return _qnetwork_call(x, stacked, block_b=block_b, matmul_dtype=matmul_dtype)


def qnetwork_pair_forward(state, action, params_q1, params_q2, *, block_b=1024,
                          matmul_dtype=jnp.bfloat16):
    """Fused SAC critic pair: one pallas_call -> (B, 2) = [Q1(s,a), Q2(s,a)]."""
    x = jnp.concatenate([state, action], axis=1)
    stacked = tuple(jnp.stack([a, b]) for a, b in zip(params_q1, params_q2))
    return _qnetwork_call(x, stacked, block_b=block_b, matmul_dtype=matmul_dtype)


def xavier_uniform(key, fan_in, fan_out, shape, dtype=jnp.float32):
    """torch.nn.init.xavier_uniform_ equivalent."""
    limit = (6.0 / (fan_in + fan_out)) ** 0.5
    return jax.random.uniform(key, shape, dtype, -limit, limit)


def init_qnetwork_params(key, feature_dim, action_dim):
    d_in = feature_dim + action_dim
    k1, k2, k3 = jax.random.split(key, 3)
    w1 = xavier_uniform(k1, d_in, HIDDEN_UNITS, (d_in, HIDDEN_UNITS))
    b1 = jnp.zeros((1, HIDDEN_UNITS), jnp.float32)
    w2 = xavier_uniform(k2, HIDDEN_UNITS, HIDDEN_UNITS, (HIDDEN_UNITS, HIDDEN_UNITS))
    b2 = jnp.zeros((1, HIDDEN_UNITS), jnp.float32)
    w3 = xavier_uniform(k3, HIDDEN_UNITS, 1, (1, HIDDEN_UNITS))   # stored (1, H) for VPU reduce
    b3 = jnp.zeros((1, 1), jnp.float32)
    return (w1, b1, w2, b2, w3, b3)


def _reference(state, action, params):
    w1, b1, w2, b2, w3, b3 = params
    x = jnp.concatenate([state, action], axis=1)
    h = jnp.maximum(x @ w1 + b1, 0.0)
    h = jnp.maximum(h @ w2 + b2, 0.0)
    return h @ w3.T + b3


if __name__ == "__main__":
    key = jax.random.PRNGKey(0)
    kp1, kp2, ks, ka, ks2, ka2 = jax.random.split(key, 6)

    feature_dim, action_dim = 12, 4
    params = init_qnetwork_params(kp1, feature_dim, action_dim)
    params_b = init_qnetwork_params(kp2, feature_dim, action_dim)

    # Small batch: single tile, f32 operands -> tight check vs reference.
    batch = 8
    state = jax.random.normal(ks, (batch, feature_dim), jnp.float32)
    action = jax.random.normal(ka, (batch, action_dim), jnp.float32)
    q = qnetwork_forward(state, action, params, matmul_dtype=jnp.float32)
    jax.block_until_ready(q)
    ref = _reference(state, action, params)
    assert q.shape == (batch, 1)
    assert jnp.allclose(q, ref, atol=1e-5, rtol=1e-5)

    # Medium batch: exercises the 2-tile grid + padding path (200 -> 2 x 104).
    big_b = 200
    state2 = jax.random.normal(ks2, (big_b, feature_dim), jnp.float32)
    action2 = jax.random.normal(ka2, (big_b, action_dim), jnp.float32)
    q2 = qnetwork_forward(state2, action2, params, matmul_dtype=jnp.float32)
    jax.block_until_ready(q2)
    ref2 = _reference(state2, action2, params)
    assert q2.shape == (big_b, 1)
    assert jnp.allclose(q2, ref2, atol=1e-4, rtol=1e-4)

    # Default bf16 matmul operands (f32 accumulate): small numerical drift expected.
    q2_bf16 = qnetwork_forward(state2, action2, params)
    jax.block_until_ready(q2_bf16)
    assert q2_bf16.shape == (big_b, 1)
    assert jnp.allclose(q2_bf16, ref2, atol=5e-2, rtol=5e-2)

    # Fused Q1/Q2 critic pair: one pallas_call, (B, 2) output.
    q_pair = qnetwork_pair_forward(state2, action2, params, params_b,
                                   matmul_dtype=jnp.float32)
    jax.block_until_ready(q_pair)
    ref_pair = jnp.concatenate([_reference(state2, action2, params),
                                _reference(state2, action2, params_b)], axis=1)
    assert q_pair.shape == (big_b, 2)
    assert jnp.allclose(q_pair, ref_pair, atol=1e-4, rtol=1e-4)

    print("KERNEL_OK")
</pallas_src>

<mosaic_0001>
module attributes {stable_mosaic.version = 11 : i64} {
  func.func @_qnet_kernel(%arg0: i32, %arg1: memref<8x16xf32, #tpu.memory_space<vmem>>, %arg2: memref<1x16x384xf32, #tpu.memory_space<vmem>>, %arg3: memref<1x1x384xf32, #tpu.memory_space<vmem>>, %arg4: memref<1x384x384xf32, #tpu.memory_space<vmem>>, %arg5: memref<1x1x384xf32, #tpu.memory_space<vmem>>, %arg6: memref<1x1x384xf32, #tpu.memory_space<vmem>>, %arg7: memref<1x1x1xf32, #tpu.memory_space<vmem>>, %arg8: memref<8x1xf32, #tpu.memory_space<vmem>>) attributes {dimension_semantics = [#tpu.dimension_semantics<parallel>], iteration_bounds = array<i64: 1>, scalar_prefetch = 0 : i64, scratch_operands = 0 : i64, tpu.core_type = #tpu.core_type<tc>, window_params = [{transform_indices = @transform_0, window_bounds = array<i64: 8, 16>}, {pipeline_mode = #tpu.pipeline_mode<synchronous>, transform_indices = @transform_1, window_bounds = array<i64: 1, 16, 384>}, {pipeline_mode = #tpu.pipeline_mode<synchronous>, transform_indices = @transform_2, window_bounds = array<i64: 1, 1, 384>}, {pipeline_mode = #tpu.pipeline_mode<synchronous>, transform_indices = @transform_3, window_bounds = array<i64: 1, 384, 384>}, {pipeline_mode = #tpu.pipeline_mode<synchronous>, transform_indices = @transform_4, window_bounds = array<i64: 1, 1, 384>}, {pipeline_mode = #tpu.pipeline_mode<synchronous>, transform_indices = @transform_5, window_bounds = array<i64: 1, 1, 384>}, {pipeline_mode = #tpu.pipeline_mode<synchronous>, transform_indices = @transform_6, window_bounds = array<i64: 1, 1, 1>}, {transform_indices = @transform_7, window_bounds = array<i64: 8, 1>}]} {
    %c0 = arith.constant 0 : index
    %c0_0 = arith.constant 0 : index
    %0 = vector.load %arg1[%c0, %c0_0] : memref<8x16xf32, #tpu.memory_space<vmem>>, vector<8x16xf32>
    %c0_1 = arith.constant 0 : index
    %c0_2 = arith.constant 0 : index
    %c0_3 = arith.constant 0 : index
    %1 = vector.load %arg2[%c0_1, %c0_2, %c0_3] : memref<1x16x384xf32, #tpu.memory_space<vmem>>, vector<1x16x384xf32>
    %2 = vector.shape_cast %1 : vector<1x16x384xf32> to vector<16x384xf32>
    %cst = arith.constant dense<0.000000e+00> : vector<8x384xf32>
    %3 = tpu.matmul %0, %2, %cst {dimension_numbers = #tpu.dot_dimension_numbers<[1], [0], [0], [1], [0, 0, 1, 1], [], []>} : vector<8x16xf32>, vector<16x384xf32>, vector<8x384xf32> -> vector<8x384xf32>
    %c0_4 = arith.constant 0 : index
    %c0_5 = arith.constant 0 : index
    %c0_6 = arith.constant 0 : index
    %4 = vector.load %arg3[%c0_4, %c0_5, %c0_6] : memref<1x1x384xf32, #tpu.memory_space<vmem>>, vector<1x1x384xf32>
    %5 = vector.shape_cast %4 : vector<1x1x384xf32> to vector<1x384xf32>
    %6 = vector.broadcast %5 : vector<1x384xf32> to vector<8x384xf32>
    %7 = arith.addf %3, %6 : vector<8x384xf32>
    %cst_7 = arith.constant 0.000000e+00 : f32
    %8 = vector.broadcast %cst_7 : f32 to vector<8x384xf32>
    %9 = arith.maximumf %7, %8 : vector<8x384xf32>
    %c0_8 = arith.constant 0 : index
    %c0_9 = arith.constant 0 : index
    %c0_10 = arith.constant 0 : index
    %10 = vector.load %arg4[%c0_8, %c0_9, %c0_10] : memref<1x384x384xf32, #tpu.memory_space<vmem>>, vector<1x384x384xf32>
    %11 = vector.shape_cast %10 : vector<1x384x384xf32> to vector<384x384xf32>
    %cst_11 = arith.constant dense<0.000000e+00> : vector<8x384xf32>
    %12 = tpu.matmul %9, %11, %cst_11 {dimension_numbers = #tpu.dot_dimension_numbers<[1], [0], [0], [1], [0, 0, 1, 1], [], []>} : vector<8x384xf32>, vector<384x384xf32>, vector<8x384xf32> -> vector<8x384xf32>
    %c0_12 = arith.constant 0 : index
    %c0_13 = arith.constant 0 : index
    %c0_14 = arith.constant 0 : index
    %13 = vector.load %arg5[%c0_12, %c0_13, %c0_14] : memref<1x1x384xf32, #tpu.memory_space<vmem>>, vector<1x1x384xf32>
    %14 = vector.shape_cast %13 : vector<1x1x384xf32> to vector<1x384xf32>
    %15 = vector.broadcast %14 : vector<1x384xf32> to vector<8x384xf32>
    %16 = arith.addf %12, %15 : vector<8x384xf32>
    %cst_15 = arith.constant 0.000000e+00 : f32
    %17 = vector.broadcast %cst_15 : f32 to vector<8x384xf32>
    %18 = arith.maximumf %16, %17 : vector<8x384xf32>
    %c0_16 = arith.constant 0 : index
    %c0_17 = arith.constant 0 : index
    %c0_18 = arith.constant 0 : index
    %19 = vector.load %arg6[%c0_16, %c0_17, %c0_18] : memref<1x1x384xf32, #tpu.memory_space<vmem>>, vector<1x1x384xf32>
    %20 = vector.shape_cast %19 : vector<1x1x384xf32> to vector<1x384xf32>
    %21 = vector.broadcast %20 : vector<1x384xf32> to vector<8x384xf32>
    %22 = arith.mulf %18, %21 : vector<8x384xf32>
    %cst_19 = arith.constant dense<0.000000e+00> : vector<8xf32>
    %23 = vector.multi_reduction <add>, %22, %cst_19 [1] : vector<8x384xf32> to vector<8xf32>
    %24 = vector.shape_cast %23 : vector<8xf32> to vector<8x1xf32>
    %c0_20 = arith.constant 0 : index
    %c0_21 = arith.constant 0 : index
    %c0_22 = arith.constant 0 : index
    %25 = vector.load %arg7[%c0_20, %c0_21, %c0_22] : memref<1x1x1xf32, #tpu.memory_space<vmem>>, vector<1x1x1xf32>
    %26 = vector.shape_cast %25 : vector<1x1x1xf32> to vector<1x1xf32>
    %27 = vector.broadcast %26 : vector<1x1xf32> to vector<8x1xf32>
    %28 = arith.addf %24, %27 : vector<8x1xf32>
    %c0_23 = arith.constant 0 : index
    %c0_24 = arith.constant 0 : index
    %29 = vector.load %arg8[%c0_23, %c0_24] : memref<8x1xf32, #tpu.memory_space<vmem>>, vector<8x1xf32>
    tpu.vector_store %arg8[%c0_23, %c0_24], %28 {strides = array<i32>} : memref<8x1xf32, #tpu.memory_space<vmem>>, vector<8x1xf32>,
    return
  }
  func.func @transform_0(%arg0: i32) -> (i32, i32) {
    %c0_i32 = arith.constant 0 : i32
    %c0_i32_0 = arith.constant 0 : i32
    return %arg0, %c0_i32 : i32, i32
  }
  func.func @transform_1(%arg0: i32) -> (i32, i32, i32) {
    %c0_i32 = arith.constant 0 : i32
    %c0_i32_0 = arith.constant 0 : i32
    %c0_i32_1 = arith.constant 0 : i32
    %c0_i32_2 = arith.constant 0 : i32
    return %c0_i32, %c0_i32_0, %c0_i32_1 : i32, i32, i32
  }
  func.func @transform_2(%arg0: i32) -> (i32, i32, i32) {
    %c0_i32 = arith.constant 0 : i32
    %c0_i32_0 = arith.constant 0 : i32
    %c0_i32_1 = arith.constant 0 : i32
    %c0_i32_2 = arith.constant 0 : i32
    return %c0_i32, %c0_i32_0, %c0_i32_1 : i32, i32, i32
  }
  func.func @transform_3(%arg0: i32) -> (i32, i32, i32) {
    %c0_i32 = arith.constant 0 : i32
    %c0_i32_0 = arith.constant 0 : i32
    %c0_i32_1 = arith.constant 0 : i32
    %c0_i32_2 = arith.constant 0 : i32
    return %c0_i32, %c0_i32_0, %c0_i32_1 : i32, i32, i32
  }
  func.func @transform_4(%arg0: i32) -> (i32, i32, i32) {
    %c0_i32 = arith.constant 0 : i32
    %c0_i32_0 = arith.constant 0 : i32
    %c0_i32_1 = arith.constant 0 : i32
    %c0_i32_2 = arith.constant 0 : i32
    return %c0_i32, %c0_i32_0, %c0_i32_1 : i32, i32, i32
  }
  func.func @transform_5(%arg0: i32) -> (i32, i32, i32) {
    %c0_i32 = arith.constant 0 : i32
    %c0_i32_0 = arith.constant 0 : i32
    %c0_i32_1 = arith.constant 0 : i32
    %c0_i32_2 = arith.constant 0 : i32
    return %c0_i32, %c0_i32_0, %c0_i32_1 : i32, i32, i32
  }
  func.func @transform_6(%arg0: i32) -> (i32, i32, i32) {
    %c0_i32 = arith.constant 0 : i32
    %c0_i32_0 = arith.constant 0 : i32
    %c0_i32_1 = arith.constant 0 : i32
    %c0_i32_2 = arith.constant 0 : i32
    return %c0_i32, %c0_i32_0, %c0_i32_1 : i32, i32, i32
  }
  func.func @transform_7(%arg0: i32) -> (i32, i32) {
    %c0_i32 = arith.constant 0 : i32
    %c0_i32_0 = arith.constant 0 : i32
    return %arg0, %c0_i32 : i32, i32
  }
}

</mosaic_0001>

<llo_original>
// kernel: tpu_custom_call.1
$region0: #{tpu_custom_call.1}
  #allocation0 [shape = 'u32[]', space=smem, size = 0x4, offset = 0x4, fixed_abs, tag = 'smem constant byte address 0x4 - core index']
  #allocation1 [shape = 'u32[72,128]{1,0:T(1,128)}', space=vmem, size = 0x9000, scoped, tag = 'internal scratch']
  #allocation2 [shape = 'f32[1,1,1]{2,1,0:T(1,128)S(1)}', space=vmem, size = 0x200, scoped, tag = 'scoped memory for tpu_custom_call.1']
  %s0 = inlined_call_operand.hbm [shape: f32[8,16], index: 0, kind: input, shape index: {}]
  %s1 = inlined_call_operand.hbm [shape: f32[1,16,384], index: 1, kind: input, shape index: {}]
  %s2 = inlined_call_operand.vmem [shape: f32[1,1,384], index: 2, kind: input, shape index: {}]
  %s3 = inlined_call_operand.hbm [shape: f32[1,384,384], index: 3, kind: input, shape index: {}]
  %s4 = inlined_call_operand.hbm [shape: f32[1,1,384], index: 4, kind: input, shape index: {}]
  %s5 = inlined_call_operand.vmem [shape: f32[1,1,384], index: 5, kind: input, shape index: {}]
  %s6 = inlined_call_operand.<no memory space> [shape: f32[1,1,1], index: 6, kind: input, shape index: {}]
  %s7 = inlined_call_operand.vmem [shape: f32[8,1], index: 7, kind: output, shape index: {}]
  %s8 = sld [smem:[#allocation0]]
  $region54: #{tpu_custom_call.1} parent=0
    _
  %s10 = ssub.s32 1, %s8
  %s11 = scalar_select 0, %s10, %s8
  %v12 = vstv %s6
  %13 = vst [vmem:[#allocation2] sm:$0x1] %v12
  $region1: #{tpu_custom_call.1} parent=0
    #allocation3 [shape = 'u8[4096]{0}', space=vmem, size = 0x1000, scoped, tag = 'input window, operand 0, single buffered']
    #allocation4 [shape = 's32[1]{0}', space=sflag, size = 0x4, scoped, tag = 'scoped memory for tpu_custom_call.1']
    #allocation5 [shape = 'u8[24576]{0}', space=vmem, size = 0x6000, scoped, tag = 'input window, operand 1, single buffered']
    #allocation6 [shape = 's32[1]{0}', space=sflag, size = 0x4, scoped, tag = 'scoped memory for tpu_custom_call.1']
    #allocation7 [shape = 'u8[589824]{0}', space=vmem, size = 0x90000, scoped, tag = 'input window, operand 3, single buffered']
    #allocation8 [shape = 'u8[1536]{0}', space=vmem, size = 0x800, scoped, tag = 'input window, operand 4, single buffered']
    #allocation9 [shape = 's32[1]{0}', space=sflag, size = 0x4, scoped, tag = 'scoped memory for tpu_custom_call.1']
    %14 = vsyncpa [#allocation4], 0
    %15 = vsyncpa [#allocation6], 0
    %16 = vsyncpa [#allocation9], 0
    // Predicated region
    $region2: #{tpu_custom_call.1} parent=1 // pred_check
      _
    $region3: #{tpu_custom_call.1} parent=1 // pred_check_branch
      %18 = sbr.rel (0) target = $region5
    $region4: #{tpu_custom_call.1} parent=1 // pred_region
      %20 = vsyncadd [#allocation4], 0
      %s22 = sshll.u32 %s0, 4
      %s23 = int_to_ptr.hbm [resolvable:$true] %s22
      %s24 = sshll.u32 [#allocation3], 4
      %s25 = int_to_ptr.vmem [resolvable:$true] %s24
      %27 = dma.hbm_to_vmem [thread:$0]  %s23, 128, %s25, [#allocation4]
    $region5: #{tpu_custom_call.1} parent=1 // pred_fallthru
      _
    // Predicated region
    $region6: #{tpu_custom_call.1} parent=1 // pred_check
      _
    $region7: #{tpu_custom_call.1} parent=1 // pred_check_branch
      %29 = sbr.rel (0) target = $region9
    $region8: #{tpu_custom_call.1} parent=1 // pred_region
      %31 = vsyncadd [#allocation6], 0
      %s32 = sshll.u32 %s1, 4
      %s33 = int_to_ptr.hbm [resolvable:$true] %s32
      %s34 = sshll.u32 [#allocation5], 4
      %s35 = int_to_ptr.vmem [resolvable:$true] %s34
      %40 = dma.hbm_to_vmem [thread:$0]  %s33, 768, %s35, [#allocation6], 384, 384, 24
    $region9: #{tpu_custom_call.1} parent=1 // pred_fallthru
      _
    // Predicated region
    $region10: #{tpu_custom_call.1} parent=1 // pred_check
      _
    $region11: #{tpu_custom_call.1} parent=1 // pred_check_branch
      %42 = sbr.rel (0) target = $region13
    $region12: #{tpu_custom_call.1} parent=1 // pred_region
      _
    $region13: #{tpu_custom_call.1} parent=1 // pred_fallthru
      _
    // Predicated region
    $region14: #{tpu_custom_call.1} parent=1 // pred_check
      _
    $region15: #{tpu_custom_call.1} parent=1 // pred_check_branch
      %44 = sbr.rel (0) target = $region17
    $region16: #{tpu_custom_call.1} parent=1 // pred_region
      %46 = vsyncadd [#allocation6], 0
      %s47 = sshll.u32 %s3, 4
      %s48 = int_to_ptr.hbm [resolvable:$true] %s47
      %s49 = sshll.u32 [#allocation7], 4
      %s50 = int_to_ptr.vmem [resolvable:$true] %s49
      %55 = dma.hbm_to_vmem [thread:$0]  %s48, 18432, %s50, [#allocation6], 384, 384, 24
    $region17: #{tpu_custom_call.1} parent=1 // pred_fallthru
      _
    // Predicated region
    $region18: #{tpu_custom_call.1} parent=1 // pred_check
      _
    $region19: #{tpu_custom_call.1} parent=1 // pred_check_branch
      %57 = sbr.rel (0) target = $region21
    $region20: #{tpu_custom_call.1} parent=1 // pred_region
      %59 = vsyncadd [#allocation9], 0
      %s61 = sshll.u32 %s4, 4
      %s62 = int_to_ptr.hbm [resolvable:$true] %s61
      %s63 = sshll.u32 [#allocation8], 4
      %s64 = int_to_ptr.vmem [resolvable:$true] %s63
      %66 = dma.hbm_to_vmem [thread:$0]  %s62, 48, %s64, [#allocation9]
    $region21: #{tpu_custom_call.1} parent=1 // pred_fallthru
      _
    // Predicated region
    $region22: #{tpu_custom_call.1} parent=1 // pred_check
      _
    $region23: #{tpu_custom_call.1} parent=1 // pred_check_branch
      %68 = sbr.rel (0) target = $region25
    $region24: #{tpu_custom_call.1} parent=1 // pred_region
      _
    $region25: #{tpu_custom_call.1} parent=1 // pred_fallthru
      _
    // Predicated region
    $region26: #{tpu_custom_call.1} parent=1 // pred_check
      _
    $region27: #{tpu_custom_call.1} parent=1 // pred_check_branch
      %70 = sbr.rel (0) target = $region29
    $region28: #{tpu_custom_call.1} parent=1 // pred_region
      _
    $region29: #{tpu_custom_call.1} parent=1 // pred_fallthru
      _
    // Predicated region
    $region30: #{tpu_custom_call.1} parent=1 // pred_check
      _
    $region31: #{tpu_custom_call.1} parent=1 // pred_check_branch
      %72 = sbr.rel (0) target = $region33
    $region32: #{tpu_custom_call.1} parent=1 // pred_region
      %74 = dma.done [#allocation4], 128
    $region33: #{tpu_custom_call.1} parent=1 // pred_fallthru
      _
    // Predicated region
    $region34: #{tpu_custom_call.1} parent=1 // pred_check
      _
    $region35: #{tpu_custom_call.1} parent=1 // pred_check_branch
      %76 = sbr.rel (0) target = $region37
    $region36: #{tpu_custom_call.1} parent=1 // pred_region
      %78 = dma.done [#allocation6], 768
    $region37: #{tpu_custom_call.1} parent=1 // pred_fallthru
      _
    // Predicated region
    $region38: #{tpu_custom_call.1} parent=1 // pred_check
      _
    $region39: #{tpu_custom_call.1} parent=1 // pred_check_branch
      %80 = sbr.rel (0) target = $region41
    $region40: #{tpu_custom_call.1} parent=1 // pred_region
      %82 = dma.done [#allocation6], 18432
    $region41: #{tpu_custom_call.1} parent=1 // pred_fallthru
      _
    // Predicated region
    $region42: #{tpu_custom_call.1} parent=1 // pred_check
      _
    $region43: #{tpu_custom_call.1} parent=1 // pred_check_branch
      %84 = sbr.rel (0) target = $region45
    $region44: #{tpu_custom_call.1} parent=1 // pred_region
      %86 = dma.done [#allocation9], 48
    $region45: #{tpu_custom_call.1} parent=1 // pred_fallthru
      _
    %v87 = vld [vmem:[#allocation3] sm:$0xff]
    %v88 = vld [vmem:[#allocation5] sm:$0xff]
    %v89 = vld [vmem:[#allocation5 + $0x8] sm:$0xff]
    %v90 = vld [vmem:[#allocation5 + $0x10] sm:$0xff]
    %v91 = vld [vmem:[#allocation5 + $0x18] sm:$0xff]
    %v92 = vld [vmem:[#allocation5 + $0x20] sm:$0xff]
    %v93 = vld [vmem:[#allocation5 + $0x28] sm:$0xff]
    %v94 = vld [vmem:[%s2] sm:$0x7]
    %v96 = vperm.slane %v94, 0
    %v97 = vperm.slane %v94, 1
    %v98 = vperm.slane %v94, 2
    %vm102 = vcmask 130048
    %v104 = vsel %vm102, %v87, 0
    %106 = vmatpush.msra.mxu0 0.0
    %107 = vmatpush.msra.mxu0 0.0
    %108 = vmatpush.msra.mxu0 0.0
    %109 = vmatpush.msra.mxu0 0.0
    %110 = vmatpush.msra.mxu0 0.0
    %111 = vmatpush.msra.mxu0 0.0
    %112 = vmatpush.msra.mxu0 0.0
    %113 = vmatpush.msra.mxu0 0.0
    %114 = vmatpush.msra.mxu0 0.0
    %115 = vmatpush.msra.mxu0 0.0
    %116 = vmatpush.msra.mxu0 0.0
    %117 = vmatpush.msra.mxu0 0.0
    %118 = vmatpush.msra.mxu0 0.0
    %119 = vmatpush.msra.mxu0 0.0
    %120 = vmatpush.msra.mxu0 %v91
    %121 = vmatpush.msra.mxu0 %v88
    %122 = vmatmul.f32.gmra.mxu0 %v104
    %v123 = vpop.f32.mrf.mxu0
    %v124 = vadd.f32 %v96, %v123
    %125 = vdwg.mxu0
    %126 = vmatpush.msra.mxu0 0.0
    %127 = vmatpush.msra.mxu0 0.0
    %128 = vmatpush.msra.mxu0 0.0
    %129 = vmatpush.msra.mxu0 0.0
    %130 = vmatpush.msra.mxu0 0.0
    %131 = vmatpush.msra.mxu0 0.0
    %132 = vmatpush.msra.mxu0 0.0
    %133 = vmatpush.msra.mxu0 0.0
    %134 = vmatpush.msra.mxu0 0.0
    %135 = vmatpush.msra.mxu0 0.0
    %136 = vmatpush.msra.mxu0 0.0
    %137 = vmatpush.msra.mxu0 0.0
    %138 = vmatpush.msra.mxu0 0.0
    %139 = vmatpush.msra.mxu0 0.0
    %140 = vmatpush.msra.mxu0 %v92
    %141 = vmatpush.msra.mxu0 %v89
    %142 = vmatmul.f32.gmra.mxu0 %v104
    %v143 = vpop.f32.mrf.mxu0
    %v144 = vadd.f32 %v97, %v143
    %145 = vdwg.mxu0
    %146 = vmatpush.msra.mxu0 0.0
    %147 = vmatpush.msra.mxu0 0.0
    %148 = vmatpush.msra.mxu0 0.0
    %149 = vmatpush.msra.mxu0 0.0
    %150 = vmatpush.msra.mxu0 0.0
    %151 = vmatpush.msra.mxu0 0.0
    %152 = vmatpush.msra.mxu0 0.0
    %153 = vmatpush.msra.mxu0 0.0
    %154 = vmatpush.msra.mxu0 0.0
    %155 = vmatpush.msra.mxu0 0.0
    %156 = vmatpush.msra.mxu0 0.0
    %157 = vmatpush.msra.mxu0 0.0
    %158 = vmatpush.msra.mxu0 0.0
    %159 = vmatpush.msra.mxu0 0.0
    %160 = vmatpush.msra.mxu0 %v93
    %161 = vmatpush.msra.mxu0 %v90
    %162 = vmatmul.f32.gmra.mxu0 %v104
    %v163 = vpop.f32.mrf.mxu0
    %v164 = vadd.f32 %v98, %v163
    %165 = vdwg.mxu0
    %v166 = vmax.f32 %v124, 0.0
    %v167 = vmax.f32 %v144, 0.0
    %v168 = vmax.f32 %v164, 0.0
    %v169 = vld [vmem:[#allocation7] sm:$0xff]
    %v170 = vld [vmem:[#allocation7 + $0x8] sm:$0xff]
    %v171 = vld [vmem:[#allocation7 + $0x10] sm:$0xff]
    %v172 = vld [vmem:[#allocation7 + $0x18] sm:$0xff]
    %v173 = vld [vmem:[#allocation7 + $0x20] sm:$0xff]
    %v174 = vld [vmem:[#allocation7 + $0x28] sm:$0xff]
    %v175 = vld [vmem:[#allocation7 + $0x30] sm:$0xff]
    %v176 = vld [vmem:[#allocation7 + $0x38] sm:$0xff]
    %v177 = vld [vmem:[#allocation7 + $0x40] sm:$0xff]
    %v178 = vld [vmem:[#allocation7 + $0x48] sm:$0xff]
    %v179 = vld [vmem:[#allocation7 + $0x50] sm:$0xff]
    %v180 = vld [vmem:[#allocation7 + $0x58] sm:$0xff]
    %v181 = vld [vmem:[#allocation7 + $0x60] sm:$0xff]
    %v182 = vld [vmem:[#allocation7 + $0x68] sm:$0xff]
    %v183 = vld [vmem:[#allocation7 + $0x70] sm:$0xff]
    %v184 = vld [vmem:[#allocation7 + $0x78] sm:$0xff]
    %v185 = vld [vmem:[#allocation7 + $0x80] sm:$0xff]
    %v186 = vld [vmem:[#allocation7 + $0x88] sm:$0xff]
    %v187 = vld [vmem:[#allocation7 + $0x90] sm:$0xff]
    %v188 = vld [vmem:[#allocation7 + $0x98] sm:$0xff]
    %v189 = vld [vmem:[#allocation7 + $0xa0] sm:$0xff]
    %v190 = vld [vmem:[#allocation7 + $0xa8] sm:$0xff]
    %v191 = vld [vmem:[#allocation7 + $0xb0] sm:$0xff]
    %v192 = vld [vmem:[#allocation7 + $0xb8] sm:$0xff]
    %v193 = vld [vmem:[#allocation7 + $0xc0] sm:$0xff]
    %v194 = vld [vmem:[#allocation7 + $0xc8] sm:$0xff]
    %v195 = vld [vmem:[#allocation7 + $0xd0] sm:$0xff]
    %v196 = vld [vmem:[#allocation7 + $0xd8] sm:$0xff]
    %v197 = vld [vmem:[#allocation7 + $0xe0] sm:$0xff]
    %v198 = vld [vmem:[#allocation7 + $0xe8] sm:$0xff]
    %v199 = vld [vmem:[#allocation7 + $0xf0] sm:$0xff]
    %v200 = vld [vmem:[#allocation7 + $0xf8] sm:$0xff]
    %v201 = vld [vmem:[#allocation7 + $0x100] sm:$0xff]
    %v202 = vld [vmem:[#allocation7 + $0x108] sm:$0xff]
    %v203 = vld [vmem:[#allocation7 + $0x110] sm:$0xff]
    %v204 = vld [vmem:[#allocation7 + $0x118] sm:$0xff]
    %v205 = vld [vmem:[#allocation7 + $0x120] sm:$0xff]
    %v206 = vld [vmem:[#allocation7 + $0x128] sm:$0xff]
    %v207 = vld [vmem:[#allocation7 + $0x130] sm:$0xff]
    %v208 = vld [vmem:[#allocation7 + $0x138] sm:$0xff]
    %v209 = vld [vmem:[#allocation7 + $0x140] sm:$0xff]
    %v210 = vld [vmem:[#allocation7 + $0x148] sm:$0xff]
    %v211 = vld [vmem:[#allocation7 + $0x150] sm:$0xff]
    %v212 = vld [vmem:[#allocation7 + $0x158] sm:$0xff]
    %v213 = vld [vmem:[#allocation7 + $0x160] sm:$0xff]
    %v214 = vld [vmem:[#allocation7 + $0x168] sm:$0xff]
    %v215 = vld [vmem:[#allocation7 + $0x170] sm:$0xff]
    %v216 = vld [vmem:[#allocation7 + $0x178] sm:$0xff]
    %v217 = vld [vmem:[#allocation7 + $0x180] sm:$0xff]
    %v218 = vld [vmem:[#allocation7 + $0x188] sm:$0xff]
    %v219 = vld [vmem:[#allocation7 + $0x190] sm:$0xff]
    %v220 = vld [vmem:[#allocation7 + $0x198] sm:$0xff]
    %v221 = vld [vmem:[#allocation7 + $0x1a0] sm:$0xff]
    %v222 = vld [vmem:[#allocation7 + $0x1a8] sm:$0xff]
    %v223 = vld [vmem:[#allocation7 + $0x1b0] sm:$0xff]
    %v224 = vld [vmem:[#allocation7 + $0x1b8] sm:$0xff]
    %v225 = vld [vmem:[#allocation7 + $0x1c0] sm:$0xff]
    %v226 = vld [vmem:[#allocation7 + $0x1c8] sm:$0xff]
    %v227 = vld [vmem:[#allocation7 + $0x1d0] sm:$0xff]
    %v228 = vld [vmem:[#allocation7 + $0x1d8] sm:$0xff]
    %v229 = vld [vmem:[#allocation7 + $0x1e0] sm:$0xff]
    %v230 = vld [vmem:[#allocation7 + $0x1e8] sm:$0xff]
    %v231 = vld [vmem:[#allocation7 + $0x1f0] sm:$0xff]
    %v232 = vld [vmem:[#allocation7 + $0x1f8] sm:$0xff]
    %v233 = vld [vmem:[#allocation7 + $0x200] sm:$0xff]
    %v234 = vld [vmem:[#allocation7 + $0x208] sm:$0xff]
    %v235 = vld [vmem:[#allocation7 + $0x210] sm:$0xff]
    %v236 = vld [vmem:[#allocation7 + $0x218] sm:$0xff]
    %v237 = vld [vmem:[#allocation7 + $0x220] sm:$0xff]
    %v238 = vld [vmem:[#allocation7 + $0x228] sm:$0xff]
    %v239 = vld [vmem:[#allocation7 + $0x230] sm:$0xff]
    %v240 = vld [vmem:[#allocation7 + $0x238] sm:$0xff]
    %v241 = vld [vmem:[#allocation7 + $0x240] sm:$0xff]
    %v242 = vld [vmem:[#allocation7 + $0x248] sm:$0xff]
    %v243 = vld [vmem:[#allocation7 + $0x250] sm:$0xff]
    %v244 = vld [vmem:[#allocation7 + $0x258] sm:$0xff]
    %v245 = vld [vmem:[#allocation7 + $0x260] sm:$0xff]
    %v246 = vld [vmem:[#allocation7 + $0x268] sm:$0xff]
    %v247 = vld [vmem:[#allocation7 + $0x270] sm:$0xff]
    %v248 = vld [vmem:[#allocation7 + $0x278] sm:$0xff]
    %v249 = vld [vmem:[#allocation7 + $0x280] sm:$0xff]
    %v250 = vld [vmem:[#allocation7 + $0x288] sm:$0xff]
    %v251 = vld [vmem:[#allocation7 + $0x290] sm:$0xff]
    %v252 = vld [vmem:[#allocation7 + $0x298] sm:$0xff]
    %v253 = vld [vmem:[#allocation7 + $0x2a0] sm:$0xff]
    %v254 = vld [vmem:[#allocation7 + $0x2a8] sm:$0xff]
    %v255 = vld [vmem:[#allocation7 + $0x2b0] sm:$0xff]
    %v256 = vld [vmem:[#allocation7 + $0x2b8] sm:$0xff]
    %v257 = vld [vmem:[#allocation7 + $0x2c0] sm:$0xff]
    %v258 = vld [vmem:[#allocation7 + $0x2c8] sm:$0xff]
    %v259 = vld [vmem:[#allocation7 + $0x2d0] sm:$0xff]
    %v260 = vld [vmem:[#allocation7 + $0x2d8] sm:$0xff]
    %v261 = vld [vmem:[#allocation7 + $0x2e0] sm:$0xff]
    %v262 = vld [vmem:[#allocation7 + $0x2e8] sm:$0xff]
    %v263 = vld [vmem:[#allocation7 + $0x2f0] sm:$0xff]
    %v264 = vld [vmem:[#allocation7 + $0x2f8] sm:$0xff]
    %v265 = vld [vmem:[#allocation7 + $0x300] sm:$0xff]
    %v266 = vld [vmem:[#allocation7 + $0x308] sm:$0xff]
    %v267 = vld [vmem:[#allocation7 + $0x310] sm:$0xff]
    %v268 = vld [vmem:[#allocation7 + $0x318] sm:$0xff]
    %v269 = vld [vmem:[#allocation7 + $0x320] sm:$0xff]
    %v270 = vld [vmem:[#allocation7 + $0x328] sm:$0xff]
    %v271 = vld [vmem:[#allocation7 + $0x330] sm:$0xff]
    %v272 = vld [vmem:[#allocation7 + $0x338] sm:$0xff]
    %v273 = vld [vmem:[#allocation7 + $0x340] sm:$0xff]
    %v274 = vld [vmem:[#allocation7 + $0x348] sm:$0xff]
    %v275 = vld [vmem:[#allocation7 + $0x350] sm:$0xff]
    %v276 = vld [vmem:[#allocation7 + $0x358] sm:$0xff]
    %v277 = vld [vmem:[#allocation7 + $0x360] sm:$0xff]
    %v278 = vld [vmem:[#allocation7 + $0x368] sm:$0xff]
    %v279 = vld [vmem:[#allocation7 + $0x370] sm:$0xff]
    %v280 = vld [vmem:[#allocation7 + $0x378] sm:$0xff]
    %v281 = vld [vmem:[#allocation7 + $0x380] sm:$0xff]
    %v282 = vld [vmem:[#allocation7 + $0x388] sm:$0xff]
    %v283 = vld [vmem:[#allocation7 + $0x390] sm:$0xff]
    %v284 = vld [vmem:[#allocation7 + $0x398] sm:$0xff]
    %v285 = vld [vmem:[#allocation7 + $0x3a0] sm:$0xff]
    %v286 = vld [vmem:[#allocation7 + $0x3a8] sm:$0xff]
    %v287 = vld [vmem:[#allocation7 + $0x3b0] sm:$0xff]
    %v288 = vld [vmem:[#allocation7 + $0x3b8] sm:$0xff]
    %v289 = vld [vmem:[#allocation7 + $0x3c0] sm:$0xff]
    %v290 = vld [vmem:[#allocation7 + $0x3c8] sm:$0xff]
    %v291 = vld [vmem:[#allocation7 + $0x3d0] sm:$0xff]
    %v292 = vld [vmem:[#allocation7 + $0x3d8] sm:$0xff]
    %v293 = vld [vmem:[#allocation7 + $0x3e0] sm:$0xff]
    %v294 = vld [vmem:[#allocation7 + $0x3e8] sm:$0xff]
    %v295 = vld [vmem:[#allocation7 + $0x3f0] sm:$0xff]
    %v296 = vld [vmem:[#allocation7 + $0x3f8] sm:$0xff]
    %v297 = vld [vmem:[#allocation7 + $0x400] sm:$0xff]
    %v298 = vld [vmem:[#allocation7 + $0x408] sm:$0xff]
    %v299 = vld [vmem:[#allocation7 + $0x410] sm:$0xff]
    %v300 = vld [vmem:[#allocation7 + $0x418] sm:$0xff]
    %v301 = vld [vmem:[#allocation7 + $0x420] sm:$0xff]
    %v302 = vld [vmem:[#allocation7 + $0x428] sm:$0xff]
    %v303 = vld [vmem:[#allocation7 + $0x430] sm:$0xff]
    %v304 = vld [vmem:[#allocation7 + $0x438] sm:$0xff]
    %v305 = vld [vmem:[#allocation7 + $0x440] sm:$0xff]
    %v306 = vld [vmem:[#allocation7 + $0x448] sm:$0xff]
    %v307 = vld [vmem:[#allocation7 + $0x450] sm:$0xff]
    %v308 = vld [vmem:[#allocation7 + $0x458] sm:$0xff]
    %v309 = vld [vmem:[#allocation7 + $0x460] sm:$0xff]
    %v310 = vld [vmem:[#allocation7 + $0x468] sm:$0xff]
    %v311 = vld [vmem:[#allocation7 + $0x470] sm:$0xff]
    %v312 = vld [vmem:[#allocation7 + $0x478] sm:$0xff]
    %v313 = vld [vmem:[#allocation8] sm:$0x7]
    %v315 = vperm.slane %v313, 0
    %v316 = vperm.slane %v313, 1
    %v317 = vperm.slane %v313, 2
    %321 = vmatpush.msra.mxu0 %v214
    %322 = vmatpush.msra.mxu0 %v211
    %323 = vmatpush.msra.mxu0 %v208
    %324 = vmatpush.msra.mxu0 %v205
    %325 = vmatpush.msra.mxu0 %v202
    %326 = vmatpush.msra.mxu0 %v199
    %327 = vmatpush.msra.mxu0 %v196
    %328 = vmatpush.msra.mxu0 %v193
    %329 = vmatpush.msra.mxu0 %v190
    %330 = vmatpush.msra.mxu0 %v187
    %331 = vmatpush.msra.mxu0 %v184
    %332 = vmatpush.msra.mxu0 %v181
    %333 = vmatpush.msra.mxu0 %v178
    %334 = vmatpush.msra.mxu0 %v175
    %335 = vmatpush.msra.mxu0 %v172
    %336 = vmatpush.msra.mxu0 %v169
    %337 = vmatmul.f32.gmra.mxu0 %v166
    %v338 = vpop.f32.mrf.mxu0
    %v339 = vadd.f32 %v315, %v338
    %340 = vdwg.mxu0
    %341 = vmatpush.msra.mxu0 %v262
    %342 = vmatpush.msra.mxu0 %v259
    %343 = vmatpush.msra.mxu0 %v256
    %344 = vmatpush.msra.mxu0 %v253
    %345 = vmatpush.msra.mxu0 %v250
    %346 = vmatpush.msra.mxu0 %v247
    %347 = vmatpush.msra.mxu0 %v244
    %348 = vmatpush.msra.mxu0 %v241
    %349 = vmatpush.msra.mxu0 %v238
    %350 = vmatpush.msra.mxu0 %v235
    %351 = vmatpush.msra.mxu0 %v232
    %352 = vmatpush.msra.mxu0 %v229
    %353 = vmatpush.msra.mxu0 %v226
    %354 = vmatpush.msra.mxu0 %v223
    %355 = vmatpush.msra.mxu0 %v220
    %356 = vmatpush.msra.mxu0 %v217
    %357 = vmatmul.f32.gmra.mxu0 %v167
    %v358 = vpop.f32.mrf.mxu0
    %v359 = vadd.f32 %v339, %v358
    %360 = vdwg.mxu0
    %361 = vmatpush.msra.mxu0 %v310
    %362 = vmatpush.msra.mxu0 %v307
    %363 = vmatpush.msra.mxu0 %v304
    %364 = vmatpush.msra.mxu0 %v301
    %365 = vmatpush.msra.mxu0 %v298
    %366 = vmatpush.msra.mxu0 %v295
    %367 = vmatpush.msra.mxu0 %v292
    %368 = vmatpush.msra.mxu0 %v289
    %369 = vmatpush.msra.mxu0 %v286
    %370 = vmatpush.msra.mxu0 %v283
    %371 = vmatpush.msra.mxu0 %v280
    %372 = vmatpush.msra.mxu0 %v277
    %373 = vmatpush.msra.mxu0 %v274
    %374 = vmatpush.msra.mxu0 %v271
    %375 = vmatpush.msra.mxu0 %v268
    %376 = vmatpush.msra.mxu0 %v265
    %377 = vmatmul.f32.gmra.mxu0 %v168
    %v378 = vpop.f32.mrf.mxu0
    %v379 = vadd.f32 %v359, %v378
    %380 = vdwg.mxu0
    %381 = vmatpush.msra.mxu0 %v215
    %382 = vmatpush.msra.mxu0 %v212
    %383 = vmatpush.msra.mxu0 %v209
    %384 = vmatpush.msra.mxu0 %v206
    %385 = vmatpush.msra.mxu0 %v203
    %386 = vmatpush.msra.mxu0 %v200
    %387 = vmatpush.msra.mxu0 %v197
    %388 = vmatpush.msra.mxu0 %v194
    %389 = vmatpush.msra.mxu0 %v191
    %390 = vmatpush.msra.mxu0 %v188
    %391 = vmatpush.msra.mxu0 %v185
    %392 = vmatpush.msra.mxu0 %v182
    %393 = vmatpush.msra.mxu0 %v179
    %394 = vmatpush.msra.mxu0 %v176
    %395 = vmatpush.msra.mxu0 %v173
    %396 = vmatpush.msra.mxu0 %v170
    %397 = vmatmul.f32.gmra.mxu0 %v166
    %v398 = vpop.f32.mrf.mxu0
    %v399 = vadd.f32 %v316, %v398
    %400 = vdwg.mxu0
    %401 = vmatpush.msra.mxu0 %v263
    %402 = vmatpush.msra.mxu0 %v260
    %403 = vmatpush.msra.mxu0 %v257
    %404 = vmatpush.msra.mxu0 %v254
    %405 = vmatpush.msra.mxu0 %v251
    %406 = vmatpush.msra.mxu0 %v248
    %407 = vmatpush.msra.mxu0 %v245
    %408 = vmatpush.msra.mxu0 %v242
    %409 = vmatpush.msra.mxu0 %v239
    %410 = vmatpush.msra.mxu0 %v236
    %411 = vmatpush.msra.mxu0 %v233
    %412 = vmatpush.msra.mxu0 %v230
    %413 = vmatpush.msra.mxu0 %v227
    %414 = vmatpush.msra.mxu0 %v224
    %415 = vmatpush.msra.mxu0 %v221
    %416 = vmatpush.msra.mxu0 %v218
    %417 = vmatmul.f32.gmra.mxu0 %v167
    %v418 = vpop.f32.mrf.mxu0
    %v419 = vadd.f32 %v399, %v418
    %420 = vdwg.mxu0
    %421 = vmatpush.msra.mxu0 %v311
    %422 = vmatpush.msra.mxu0 %v308
    %423 = vmatpush.msra.mxu0 %v305
    %424 = vmatpush.msra.mxu0 %v302
    %425 = vmatpush.msra.mxu0 %v299
    %426 = vmatpush.msra.mxu0 %v296
    %427 = vmatpush.msra.mxu0 %v293
    %428 = vmatpush.msra.mxu0 %v290
    %429 = vmatpush.msra.mxu0 %v287
    %430 = vmatpush.msra.mxu0 %v284
    %431 = vmatpush.msra.mxu0 %v281
    %432 = vmatpush.msra.mxu0 %v278
    %433 = vmatpush.msra.mxu0 %v275
    %434 = vmatpush.msra.mxu0 %v272
    %435 = vmatpush.msra.mxu0 %v269
    %436 = vmatpush.msra.mxu0 %v266
    %437 = vmatmul.f32.gmra.mxu0 %v168
    %v438 = vpop.f32.mrf.mxu0
    %v439 = vadd.f32 %v419, %v438
    %440 = vdwg.mxu0
    %441 = vmatpush.msra.mxu0 %v216
    %442 = vmatpush.msra.mxu0 %v213
    %443 = vmatpush.msra.mxu0 %v210
    %444 = vmatpush.msra.mxu0 %v207
    %445 = vmatpush.msra.mxu0 %v204
    %446 = vmatpush.msra.mxu0 %v201
    %447 = vmatpush.msra.mxu0 %v198
    %448 = vmatpush.msra.mxu0 %v195
    %449 = vmatpush.msra.mxu0 %v192
    %450 = vmatpush.msra.mxu0 %v189
    %451 = vmatpush.msra.mxu0 %v186
    %452 = vmatpush.msra.mxu0 %v183
    %453 = vmatpush.msra.mxu0 %v180
    %454 = vmatpush.msra.mxu0 %v177
    %455 = vmatpush.msra.mxu0 %v174
    %456 = vmatpush.msra.mxu0 %v171
    %457 = vmatmul.f32.gmra.mxu0 %v166
    %v458 = vpop.f32.mrf.mxu0
    %v459 = vadd.f32 %v317, %v458
    %460 = vdwg.mxu0
    %461 = vmatpush.msra.mxu0 %v264
    %462 = vmatpush.msra.mxu0 %v261
    %463 = vmatpush.msra.mxu0 %v258
    %464 = vmatpush.msra.mxu0 %v255
    %465 = vmatpush.msra.mxu0 %v252
    %466 = vmatpush.msra.mxu0 %v249
    %467 = vmatpush.msra.mxu0 %v246
    %468 = vmatpush.msra.mxu0 %v243
    %469 = vmatpush.msra.mxu0 %v240
    %470 = vmatpush.msra.mxu0 %v237
    %471 = vmatpush.msra.mxu0 %v234
    %472 = vmatpush.msra.mxu0 %v231
    %473 = vmatpush.msra.mxu0 %v228
    %474 = vmatpush.msra.mxu0 %v225
    %475 = vmatpush.msra.mxu0 %v222
    %476 = vmatpush.msra.mxu0 %v219
    %477 = vmatmul.f32.gmra.mxu0 %v167
    %v478 = vpop.f32.mrf.mxu0
    %v479 = vadd.f32 %v459, %v478
    %480 = vdwg.mxu0
    %481 = vmatpush.msra.mxu0 %v312
    %482 = vmatpush.msra.mxu0 %v309
    %483 = vmatpush.msra.mxu0 %v306
    %484 = vmatpush.msra.mxu0 %v303
    %485 = vmatpush.msra.mxu0 %v300
    %486 = vmatpush.msra.mxu0 %v297
    %487 = vmatpush.msra.mxu0 %v294
    %488 = vmatpush.msra.mxu0 %v291
    %489 = vmatpush.msra.mxu0 %v288
    %490 = vmatpush.msra.mxu0 %v285
    %491 = vmatpush.msra.mxu0 %v282
    %492 = vmatpush.msra.mxu0 %v279
    %493 = vmatpush.msra.mxu0 %v276
    %494 = vmatpush.msra.mxu0 %v273
    %495 = vmatpush.msra.mxu0 %v270
    %496 = vmatpush.msra.mxu0 %v267
    %497 = vmatmul.f32.gmra.mxu0 %v168
    %v498 = vpop.f32.mrf.mxu0
    %v499 = vadd.f32 %v479, %v498
    %500 = vdwg.mxu0
    %v501 = vmax.f32 %v379, 0.0
    %v502 = vmax.f32 %v439, 0.0
    %v503 = vmax.f32 %v499, 0.0
    %v504 = vld [vmem:[%s5] sm:$0x7]
    %v506 = vperm.slane %v504, 0
    %v507 = vperm.slane %v504, 1
    %v508 = vperm.slane %v504, 2
    %v512 = vmul.f32 %v501, %v506
    %v513 = vmul.f32 %v502, %v507
    %v514 = vmul.f32 %v503, %v508
    %v515 = vadd.f32 %v512, %v513
    %v516 = vadd.f32 %v515, %v514
    %517 = vadd.xlane.f32.xlu0 %v516
    %v518 = vpop.xlane.xlu0 %517
    %v519 = vld [vmem:[#allocation2] sm:$0x1]
    %v521 = vperm.slane %v519, 0
    %v523 = vadd.f32 %v518, %v521
    %vm524 = vcmask 7168
    %525 = vst.msk [vmem:[%s7] sm:$0xff] %vm524, %v523
    // Predicated region
    $region46: #{tpu_custom_call.1} parent=1 // pred_check
      _
    $region47: #{tpu_custom_call.1} parent=1 // pred_check_branch
      %527 = sbr.rel (0) target = $region49
    $region48: #{tpu_custom_call.1} parent=1 // pred_region
      _
    $region49: #{tpu_custom_call.1} parent=1 // pred_fallthru
      _
    // Predicated region
    $region50: #{tpu_custom_call.1} parent=1 // pred_check
      _
    $region51: #{tpu_custom_call.1} parent=1 // pred_check_branch
      %529 = sbr.rel (0) target = $region53
    $region52: #{tpu_custom_call.1} parent=1 // pred_region
      _
    $region53: #{tpu_custom_call.1} parent=1 // pred_fallthru
      _
    %530 = vsyncpa [#allocation4], 1
    %531 = vsyncpa [#allocation6], 1
    %532 = vsyncpa [#allocation9], 1

</llo_original>
